<compile_context>
chip_gen: v5e
topology: v5e:2x2
jax: 0.10.0
libtpu: 0.0.40
codegen_flags: <defaults>
</compile_context>

<pallas_src>
import functools

import jax
import jax.numpy as jnp
from jax.experimental import pallas as pl
from jax.experimental.pallas import tpu as pltpu


def _rmsnorm_kernel(x_ref, w_ref, o_ref, *, eps, input_dtype):
    # Upcast to f32 (matches hidden_states.to(torch.float32)).
    x = x_ref[...].astype(jnp.float32)
    variance = jnp.mean(x * x, axis=-1, keepdims=True)   # XLU lane reduce
    inv = jax.lax.rsqrt(variance + eps)                   # EUP
    y = x * inv                                            # VPU
    # Cast back to the original input dtype, then multiply by weight
    # (weight * hidden_states.to(input_dtype) in the PyTorch code).
    o_ref[...] = (w_ref[...] * y.astype(input_dtype)).astype(o_ref.dtype)


def _round_up(x, m):
    return (x + m - 1) // m * m


def _sublane_multiple(dtype):
    # f32 -> 8, bf16/f16 -> 16, int8/fp8 -> 32 (packed sublanes).
    bits = jnp.dtype(dtype).itemsize * 8
    return max(8, 256 // bits)


def _vmem_capacity_bytes():
    try:
        return int(pltpu.get_tpu_info().vmem_capacity_bytes)
    except Exception:
        return 64 * 1024 * 1024   # conservative (v7x per-TC size)


def internlm2_rmsnorm(hidden_states, weight, eps=1e-6, *, out_dtype=None,
                      min_steps=8):
    """Pallas RMSNorm. hidden_states: (..., hidden); weight: (hidden,).

    out_dtype=None reproduces PyTorch promotion (weight.dtype x input dtype).
    Pass out_dtype=hidden_states.dtype to cut output HBM traffic when the
    caller accepts the narrower store (deviates from strict PyTorch parity).
    """
    orig_shape = hidden_states.shape
    hidden = orig_shape[-1]
    x2d = hidden_states.reshape(-1, hidden)
    rows = x2d.shape[0]

    if out_dtype is None:
        out_dtype = jnp.promote_types(weight.dtype, hidden_states.dtype)

    in_itemsize = jnp.dtype(hidden_states.dtype).itemsize
    out_itemsize = jnp.dtype(out_dtype).itemsize
    sub = _sublane_multiple(hidden_states.dtype)

    # --- Generation-aware VMEM budgets ---------------------------------------
    vmem_cap = _vmem_capacity_bytes()
    if vmem_cap >= 96 * 1024 * 1024:          # v5e / v6e: 128 MiB physical VMEM
        vmem_limit_bytes = 100 * 1024 * 1024
        tile_budget_bytes = 48 * 1024 * 1024  # total per-step footprint budget
    else:                                      # v7x: 64 MiB per TensorCore
        vmem_limit_bytes = 40 * 1024 * 1024
        tile_budget_bytes = 18 * 1024 * 1024

    # --- Row-tile selection from the TOTAL per-step VMEM footprint -----------
    # double-buffered input + double-buffered output + ~2 f32 temporaries
    # (the upcast x and normalized y) that Mosaic materializes per tile.
    per_row_bytes = hidden * (2 * in_itemsize + 2 * out_itemsize + 2 * 4)
    tm = max(sub, (tile_budget_bytes // per_row_bytes) // sub * sub)
    # Keep several grid steps when there is enough work: the single "parallel"
    # axis is split across both v7x TensorCores, and >= min_steps/2 iterations
    # per core keeps the software pipeline (prefetch/writeback overlap) warm.
    if rows > sub:
        tm = min(tm, max(sub, _round_up(pl.cdiv(rows, min_steps), sub)))
    tm = min(tm, max(sub, _round_up(rows, sub)))

    # No padding / slicing: the trailing partial block (rows % tm != 0) is
    # handled by Pallas with padded reads and clipped stores; RMSNorm is
    # row-independent so the pad region cannot affect valid rows.
    grid = (pl.cdiv(rows, tm),)
    w2d = weight.reshape(1, hidden)

    kernel = functools.partial(
        _rmsnorm_kernel, eps=eps, input_dtype=hidden_states.dtype
    )

    out = pl.pallas_call(
        kernel,
        out_shape=jax.ShapeDtypeStruct((rows, hidden), out_dtype),
        grid_spec=pltpu.PrefetchScalarGridSpec(
            num_scalar_prefetch=0,
            grid=grid,
            in_specs=[
                pl.BlockSpec((tm, hidden), lambda i: (i, 0)),
                pl.BlockSpec((1, hidden), lambda i: (0, 0)),   # weight resident
            ],
            out_specs=pl.BlockSpec((tm, hidden), lambda i: (i, 0)),
        ),
        compiler_params=pltpu.CompilerParams(
            dimension_semantics=("parallel",),
            vmem_limit_bytes=vmem_limit_bytes,
        ),
    )(x2d, w2d)

    return out.reshape(orig_shape[:-1] + (hidden,))


def _reference(x, weight, eps):
    x_f32 = x.astype(jnp.float32)
    var = jnp.mean(x_f32 * x_f32, axis=-1, keepdims=True)
    return weight * (x_f32 * jax.lax.rsqrt(var + eps)).astype(x.dtype)


if __name__ == "__main__":
    eps = 1e-6
    key = jax.random.PRNGKey(0)
    k0, k1, k2 = jax.random.split(key, 3)

    # --- Small demo shape consistent with the module's forward ---------------
    batch, seq, hidden = 2, 8, 32
    x = jax.random.normal(k0, (batch, seq, hidden), dtype=jnp.float32)
    weight = jnp.ones((hidden,), dtype=jnp.float32)   # torch.ones(hidden_size)

    out = jax.block_until_ready(internlm2_rmsnorm(x, weight, eps=eps))
    ref = _reference(x, weight, eps)
    assert out.shape == x.shape
    assert out.dtype == ref.dtype
    assert jnp.allclose(out, ref, atol=1e-5, rtol=1e-5)

    # --- Non-divisible row count exercises the partial-final-block path ------
    x2 = jax.random.normal(k1, (3, 5, hidden), dtype=jnp.float32)
    out2 = jax.block_until_ready(internlm2_rmsnorm(x2, weight, eps=eps))
    ref2 = _reference(x2, weight, eps)
    assert out2.shape == x2.shape
    assert jnp.allclose(out2, ref2, atol=1e-5, rtol=1e-5)

    # --- bf16 activations with f32 weight (PyTorch promotion -> f32 out) -----
    x3 = jax.random.normal(k2, (batch, seq, hidden), dtype=jnp.bfloat16)
    out3 = jax.block_until_ready(internlm2_rmsnorm(x3, weight, eps=eps))
    ref3 = _reference(x3, weight, eps)
    assert out3.dtype == ref3.dtype
    assert jnp.allclose(out3.astype(jnp.float32), ref3.astype(jnp.float32),
                        atol=2e-2, rtol=2e-2)

    print("KERNEL_OK")
</pallas_src>

<mosaic_0001>
module attributes {stable_mosaic.version = 11 : i64} {
  func.func @_rmsnorm_kernel(%arg0: i32, %arg1: memref<8x32xf32, #tpu.memory_space<vmem>>, %arg2: memref<1x32xf32, #tpu.memory_space<vmem>>, %arg3: memref<8x32xf32, #tpu.memory_space<vmem>>) attributes {dimension_semantics = [#tpu.dimension_semantics<parallel>], iteration_bounds = array<i64: 2>, scalar_prefetch = 0 : i64, scratch_operands = 0 : i64, tpu.core_type = #tpu.core_type<tc>, window_params = [{transform_indices = @transform_0, window_bounds = array<i64: 8, 32>}, {pipeline_mode = #tpu.pipeline_mode<synchronous>, transform_indices = @transform_1, window_bounds = array<i64: 1, 32>}, {transform_indices = @transform_2, window_bounds = array<i64: 8, 32>}]} {
    %c0 = arith.constant 0 : index
    %c0_0 = arith.constant 0 : index
    %0 = vector.load %arg1[%c0, %c0_0] : memref<8x32xf32, #tpu.memory_space<vmem>>, vector<8x32xf32>
    %1 = arith.mulf %0, %0 : vector<8x32xf32>
    %cst = arith.constant dense<0.000000e+00> : vector<8xf32>
    %2 = vector.multi_reduction <add>, %1, %cst [1] : vector<8x32xf32> to vector<8xf32>
    %3 = vector.shape_cast %2 : vector<8xf32> to vector<8x1xf32>
    %cst_1 = arith.constant 3.200000e+01 : f32
    %4 = vector.broadcast %cst_1 : f32 to vector<8x1xf32>
    %5 = arith.divf %3, %4 : vector<8x1xf32>
    %cst_2 = arith.constant 9.99999997E-7 : f32
    %6 = vector.broadcast %cst_2 : f32 to vector<8x1xf32>
    %7 = arith.addf %5, %6 : vector<8x1xf32>
    %8 = math.rsqrt %7 : vector<8x1xf32>
    %9 = vector.broadcast %8 : vector<8x1xf32> to vector<8x32xf32>
    %10 = arith.mulf %0, %9 : vector<8x32xf32>
    %c0_3 = arith.constant 0 : index
    %c0_4 = arith.constant 0 : index
    %11 = vector.load %arg2[%c0_3, %c0_4] : memref<1x32xf32, #tpu.memory_space<vmem>>, vector<1x32xf32>
    %12 = vector.broadcast %11 : vector<1x32xf32> to vector<8x32xf32>
    %13 = arith.mulf %12, %10 : vector<8x32xf32>
    %c0_5 = arith.constant 0 : index
    %c0_6 = arith.constant 0 : index
    %14 = vector.load %arg3[%c0_5, %c0_6] : memref<8x32xf32, #tpu.memory_space<vmem>>, vector<8x32xf32>
    tpu.vector_store %arg3[%c0_5, %c0_6], %13 {strides = array<i32>} : memref<8x32xf32, #tpu.memory_space<vmem>>, vector<8x32xf32>,
    return
  }
  func.func @transform_0(%arg0: i32) -> (i32, i32) {
    %c0_i32 = arith.constant 0 : i32
    %c0_i32_0 = arith.constant 0 : i32
    return %arg0, %c0_i32 : i32, i32
  }
  func.func @transform_1(%arg0: i32) -> (i32, i32) {
    %c0_i32 = arith.constant 0 : i32
    %c0_i32_0 = arith.constant 0 : i32
    %c0_i32_1 = arith.constant 0 : i32
    return %c0_i32, %c0_i32_0 : i32, i32
  }
  func.func @transform_2(%arg0: i32) -> (i32, i32) {
    %c0_i32 = arith.constant 0 : i32
    %c0_i32_0 = arith.constant 0 : i32
    return %arg0, %c0_i32 : i32, i32
  }
}

</mosaic_0001>

<llo_original>
// kernel: tpu_custom_call.1
$region0: #{tpu_custom_call.1}
  #allocation0 [shape = 'u32[]', space=smem, size = 0x4, offset = 0x4, fixed_abs, tag = 'smem constant byte address 0x4 - core index']
  #allocation1 [shape = 'u32[72,128]{1,0:T(1,128)}', space=vmem, size = 0x9000, scoped, tag = 'internal scratch']
  %s0 = inlined_call_operand.hbm [shape: f32[16,32], index: 0, kind: input, shape index: {}]
  %s1 = inlined_call_operand.hbm [shape: f32[1,32], index: 1, kind: input, shape index: {}]
  %s2 = inlined_call_operand.hbm [shape: f32[16,32], index: 2, kind: output, shape index: {}]
  %s3 = sld [smem:[#allocation0]]
  $region49: #{tpu_custom_call.1} parent=0
    _
  %s5 = ssub.s32 1, %s3
  %s6 = scalar_select 0, %s5, %s3
  $region1: #{tpu_custom_call.1} parent=0
    #allocation2 [shape = 'u8[8192]{0}', space=vmem, size = 0x2000, scoped, tag = 'input window, operand 0']
    #allocation3 [shape = 's32[2]{0}', space=sflag, size = 0x8, scoped, tag = 'scoped memory for tpu_custom_call.1']
    #allocation4 [shape = 's32[2]{0}', space=sflag, size = 0x8, scoped, tag = 'scoped memory for tpu_custom_call.1']
    #allocation5 [shape = 'u8[512]{0}', space=vmem, size = 0x400, scoped, tag = 'input window, operand 1, single buffered']
    #allocation6 [shape = 's32[1]{0}', space=sflag, size = 0x4, scoped, tag = 'scoped memory for tpu_custom_call.1']
    #allocation7 [shape = 'u8[8192]{0}', space=vmem, size = 0x2000, scoped, tag = 'output window, operand 0']
    %7 = vsyncpa [#allocation3], 0
    %s8 = scalar_lea.sflag [#allocation3], 1
    %9 = vsyncpa %s8, 0
    %10 = vsyncpa [#allocation6], 0
    %11 = vsyncpa [#allocation4], 0
    %s12 = scalar_lea.sflag [#allocation4], 1
    %13 = vsyncpa %s12, 0
    loop: start=0, step=1, limit=4
    $region2: #{tpu_custom_call.1} parent=1 // loop_pre_header
      _
    $region3: #{tpu_custom_call.1} parent=1 // loop_header
      %s15 = sphi 0, %s19
      %p16 = scmp.ge.s32.totalorder %s15, 4
      %s25 = sphi 0, %s27
      %s28 = sphi 0, %s25
      %s29 = sphi 0, %s28
      %s45 = sphi 0, %s29
      %s49 = sphi 0, %s49
      %s51 = sphi 0, %s49
      %s52 = sphi 0, %s51
      %s66 = sphi 0, %s52
      %s72 = sphi 0, %s74
      %s75 = sphi 0, %s72
      %s76 = sphi 0, %s75
      %s92 = sphi 0, %s76
    $region4: #{tpu_custom_call.1} parent=1 // loop_header_branch
      %18 = sbr.rel (%p16) target = $region8
    $region5: #{tpu_custom_call.1} parent=1 // loop_body
      %s20 = ssub.s32 %s15, 1
      %s21 = ssub.s32 %s15, 2
      %s22 = sadd.s32 %s15, 1
      %s23 = ssub.s32 %s15, %s22
      %p24 = scmp.eq.s32.totalorder %s23, 0
      %s26 = sadd.s32 %s25, 1
      %s27 = scalar_select %p24, %s25, %s26
      %p30 = pneg %p24
      %p31 = scmp.eq.s32.totalorder %s15, 1
      %p32 = por %p30, %p31
      %p33 = scmp.ne.s32.totalorder %s25, %s28
      %p34 = scmp.eq.s32.totalorder %s15, 0
      %p35 = por %p33, %p34
      %p36 = scmp.ne.s32.totalorder %s25, %s28
      %p37 = scmp.eq.s32.totalorder %s20, 1
      %p38 = por %p36, %p37
      %p39 = scmp.ne.s32.totalorder %s28, %s29
      %p40 = scmp.eq.s32.totalorder %s20, 0
      %p41 = por %p39, %p40
      %p42 = scmp.ne.s32.totalorder %s28, %s29
      %p43 = scmp.eq.s32.totalorder %s21, 1
      %p44 = por %p42, %p43
      %p46 = scmp.ne.s32.totalorder %s29, %s45
      %p47 = scmp.eq.s32.totalorder %s21, 0
      %p48 = por %p46, %p47
      %s50 = sadd.s32 %s49, 1
      %p53 = scmp.eq.s32.totalorder %s15, 1
      %p54 = scmp.ne.s32.totalorder %s49, %s51
      %p55 = scmp.eq.s32.totalorder %s15, 0
      %p56 = por %p54, %p55
      %p57 = scmp.ne.s32.totalorder %s49, %s51
      %p58 = scmp.eq.s32.totalorder %s20, 1
      %p59 = por %p57, %p58
      %p60 = scmp.ne.s32.totalorder %s51, %s52
      %p61 = scmp.eq.s32.totalorder %s20, 0
      %p62 = por %p60, %p61
      %p63 = scmp.ne.s32.totalorder %s51, %s52
      %p64 = scmp.eq.s32.totalorder %s21, 1
      %p65 = por %p63, %p64
      %p67 = scmp.ne.s32.totalorder %s52, %s66
      %p68 = scmp.eq.s32.totalorder %s21, 0
      %p69 = por %p67, %p68
      %s70 = ssub.s32 %s15, %s22
      %p71 = scmp.eq.s32.totalorder %s70, 0
      %s73 = sadd.s32 %s72, 1
      %s74 = scalar_select %p71, %s72, %s73
      %p77 = pneg %p71
      %p78 = scmp.eq.s32.totalorder %s15, 1
      %p79 = por %p77, %p78
      %p80 = scmp.ne.s32.totalorder %s72, %s75
      %p81 = scmp.eq.s32.totalorder %s15, 0
      %p82 = por %p80, %p81
      %p83 = scmp.ne.s32.totalorder %s72, %s75
      %p84 = scmp.eq.s32.totalorder %s20, 1
      %p85 = por %p83, %p84
      %p86 = scmp.ne.s32.totalorder %s75, %s76
      %p87 = scmp.eq.s32.totalorder %s20, 0
      %p88 = por %p86, %p87
      %p89 = scmp.ne.s32.totalorder %s75, %s76
      %p90 = scmp.eq.s32.totalorder %s21, 1
      %p91 = por %p89, %p90
      %p93 = scmp.ne.s32.totalorder %s76, %s92
      %p94 = scmp.eq.s32.totalorder %s21, 0
      %p95 = por %p93, %p94
      %p96 = scmp.le.s32.totalorder 1, %s15
      %p97 = scmp.lt.s32.totalorder %s15, 3
      %p98 = pnand %p96, %p97
      %p99 = pneg %p98
      // Predicated region
      $region9: #{tpu_custom_call.1} parent=5 // pred_check
        _
      $region10: #{tpu_custom_call.1} parent=5 // pred_check_branch
        %101 = sbr.rel (%p98) target = $region12
      $region11: #{tpu_custom_call.1} parent=5 // pred_region
        %s102 = ssub.s32 %s15, 1
        // Predicated region
        $region13: #{tpu_custom_call.1} parent=11 // pred_check
          %p103 = pneg %p62
        $region14: #{tpu_custom_call.1} parent=11 // pred_check_branch
          %105 = sbr.rel (%p103) target = $region16
        $region15: #{tpu_custom_call.1} parent=11 // pred_region
          %107 = vsyncadd [#allocation6], 0
          %s109 = sshll.u32 %s1, 4
          %s110 = int_to_ptr.hbm [resolvable:$true] %s109
          %s111 = sshll.u32 [#allocation5], 4
          %s112 = int_to_ptr.vmem [resolvable:$true] %s111
          %114 = dma.hbm_to_vmem [thread:$0]  %s110, 16, %s112, [#allocation6]
        $region16: #{tpu_custom_call.1} parent=11 // pred_fallthru
          _
      $region12: #{tpu_custom_call.1} parent=5 // pred_fallthru
        _
      %p115 = scmp.lt.s32.totalorder %s15, 2
      // Predicated region
      $region17: #{tpu_custom_call.1} parent=5 // pred_check
        %p116 = pneg %p115
      $region18: #{tpu_custom_call.1} parent=5 // pred_check_branch
        %118 = sbr.rel (%p116) target = $region20
      $region19: #{tpu_custom_call.1} parent=5 // pred_region
        // Predicated region
        $region21: #{tpu_custom_call.1} parent=19 // pred_check
          %p119 = pneg %p35
        $region22: #{tpu_custom_call.1} parent=19 // pred_check_branch
          %121 = sbr.rel (%p119) target = $region24
        $region23: #{tpu_custom_call.1} parent=19 // pred_region
          %s122 = sand.u32 %s25, 1
          %s123 = scalar_lea.sflag [#allocation3], %s122
          %s124 = sand.u32 %s25, 1
          %s125 = smul.addr %s124, 8
          %s126 = scalar_lea.vmem [#allocation2], %s125
          %128 = vsyncadd %s123, 0
          %s129 = smul.addr %s15, 8
          %s130 = scalar_lea.hbm %s0, %s129
          %s132 = sshll.u32 %s130, 4
          %s133 = int_to_ptr.hbm [resolvable:$true] %s132
          %s134 = sshll.u32 %s126, 4
          %s135 = int_to_ptr.vmem [resolvable:$true] %s134
          %137 = dma.hbm_to_vmem [thread:$0]  %s133, 128, %s135, %s123
        $region24: #{tpu_custom_call.1} parent=19 // pred_fallthru
          _
      $region20: #{tpu_custom_call.1} parent=5 // pred_fallthru
        _
      %p138 = scmp.le.s32.totalorder 1, %s15
      %p139 = scmp.lt.s32.totalorder %s15, 3
      %p140 = pnand %p138, %p139
      %p141 = pneg %p140
      // Predicated region
      $region25: #{tpu_custom_call.1} parent=5 // pred_check
        _
      $region26: #{tpu_custom_call.1} parent=5 // pred_check_branch
        %143 = sbr.rel (%p140) target = $region28
      $region27: #{tpu_custom_call.1} parent=5 // pred_region
        %s144 = ssub.s32 %s15, 1
        %s145 = sand.u32 %s28, 1
        %s146 = scalar_lea.sflag [#allocation3], %s145
        %s147 = sand.u32 %s28, 1
        %s148 = smul.addr %s147, 8
        %s149 = scalar_lea.vmem [#allocation2], %s148
        // Predicated region
        $region29: #{tpu_custom_call.1} parent=27 // pred_check
          %p150 = pneg %p41
        $region30: #{tpu_custom_call.1} parent=27 // pred_check_branch
          %152 = sbr.rel (%p150) target = $region32
        $region31: #{tpu_custom_call.1} parent=27 // pred_region
          %154 = dma.done %s146, 128
        $region32: #{tpu_custom_call.1} parent=27 // pred_fallthru
          _
        // Predicated region
        $region33: #{tpu_custom_call.1} parent=27 // pred_check
          %p155 = pneg %p62
        $region34: #{tpu_custom_call.1} parent=27 // pred_check_branch
          %157 = sbr.rel (%p155) target = $region36
        $region35: #{tpu_custom_call.1} parent=27 // pred_region
          %159 = dma.done [#allocation6], 16
        $region36: #{tpu_custom_call.1} parent=27 // pred_fallthru
          _
        %s160 = sand.u32 %s28, 1
        %s161 = scalar_lea.sflag [#allocation3], %s160
        %s162 = sand.u32 %s28, 1
        %s163 = smul.addr %s162, 8
        %s164 = scalar_lea.vmem [#allocation2], %s163
        %p165 = pneg %p41
        %p166 = pneg %p38
        %p167 = pneg %p62
        %p168 = pneg %p59
        %p169 = pneg %p88
        %p170 = pneg %p85
        %s171 = sand.u32 %s75, 1
        %s172 = scalar_lea.sflag [#allocation4], %s171
        %s173 = sand.u32 %s75, 1
        %s174 = smul.addr %s173, 8
        %s175 = scalar_lea.vmem [#allocation7], %s174
        %v176 = vld [vmem:[%s149] sm:$0xff]
        %v177 = vmul.f32 %v176, %v176
        %vm178 = vcmask 261120
        %v179 = vsel %vm178, %v177, 0.0
        %180 = vadd.xlane.f32.xlu0 %v179
        %v181 = vpop.xlane.xlu0 %180
        %v182 = vrcp.pop 32.0
        %v183 = vmul.f32 32.0, %v182
        %v184 = vsub.f32 1.0, %v183
        %v185 = vmul.f32 %v182, %v184
        %v186 = vadd.f32 %v182, %v185
        %vm187 = vweird.f32 %v182
        %v188 = vsel %vm187, %v182, %v186
        %v189 = vmul.f32 %v181, %v188
        %v190 = vadd.f32 %v189, 1e-06
        %v191 = vrsqrt.pop %v190
        %v192 = vmul.f32 %v191, %v190
        %v193 = vmul.f32 %v192, %v191
        %v194 = vmul.f32 0.5, %v193
        %v195 = vsub.f32 1.5, %v194
        %v196 = vmul.f32 %v191, %v195
        %vm197 = vweird.f32 %v190
        %vm198 = vweird.f32 %v191
        %vm199 = vmor %vm197, %vm198
        %v200 = vsel %vm199, %v191, %v196
        %v201 = vmul.f32 %v176, %v200
        %v202 = vld [vmem:[#allocation5] sm:$0x1]
        %v204 = vperm.slane %v202, 0
        %v206 = vmul.f32 %v204, %v201
        %207 = vst.msk [vmem:[%s175] sm:$0xff] %vm178, %v206
        %s208 = sand.u32 %s75, 1
        %s209 = scalar_lea.sflag [#allocation4], %s208
        %s210 = sand.u32 %s75, 1
        %s211 = smul.addr %s210, 8
        %s212 = scalar_lea.vmem [#allocation7], %s211
        // Predicated region
        $region37: #{tpu_custom_call.1} parent=27 // pred_check
          %p213 = pneg %p85
        $region38: #{tpu_custom_call.1} parent=27 // pred_check_branch
          %215 = sbr.rel (%p213) target = $region40
        $region39: #{tpu_custom_call.1} parent=27 // pred_region
          %217 = vsyncadd %s209, 0
          %s218 = smul.addr %s20, 8
          %s219 = scalar_lea.hbm %s2, %s218
          %s221 = sshll.u32 %s212, 4
          %s222 = int_to_ptr.vmem [resolvable:$true] %s221
          %s223 = sshll.u32 %s219, 4
          %s224 = int_to_ptr.hbm [resolvable:$true] %s223
          %226 = dma.vmem_to_hbm [thread:$0]  %s222, 128, %s224, %s209
        $region40: #{tpu_custom_call.1} parent=27 // pred_fallthru
          _
      $region28: #{tpu_custom_call.1} parent=5 // pred_fallthru
        _
      %p227 = scmp.le.s32.totalorder 2, %s15
      // Predicated region
      $region41: #{tpu_custom_call.1} parent=5 // pred_check
        %p228 = pneg %p227
      $region42: #{tpu_custom_call.1} parent=5 // pred_check_branch
        %230 = sbr.rel (%p228) target = $region44
      $region43: #{tpu_custom_call.1} parent=5 // pred_region
        %s231 = ssub.s32 %s15, 2
        // Predicated region
        $region45: #{tpu_custom_call.1} parent=43 // pred_check
          %p232 = pneg %p91
        $region46: #{tpu_custom_call.1} parent=43 // pred_check_branch
          %234 = sbr.rel (%p232) target = $region48
        $region47: #{tpu_custom_call.1} parent=43 // pred_region
          %s235 = sand.u32 %s76, 1
          %s236 = scalar_lea.sflag [#allocation4], %s235
          %s237 = sand.u32 %s76, 1
          %s238 = smul.addr %s237, 8
          %s239 = scalar_lea.vmem [#allocation7], %s238
          %241 = dma.done %s236, 128
        $region48: #{tpu_custom_call.1} parent=43 // pred_fallthru
          _
      $region44: #{tpu_custom_call.1} parent=5 // pred_fallthru
        _
    $region6: #{tpu_custom_call.1} parent=1 // loop_footer
      %s19 = sadd.s32 1, %s15
    $region7: #{tpu_custom_call.1} parent=1 // loop_footer_branch
      %14 = sbr.rel target = $region3
    $region8: #{tpu_custom_call.1} parent=1 // loop_exit
      _
    %242 = vsyncpa [#allocation3], 1
    %s243 = scalar_lea.sflag [#allocation3], 1
    %244 = vsyncpa %s243, 1
    %245 = vsyncpa [#allocation6], 1
    %246 = vsyncpa [#allocation4], 1
    %s247 = scalar_lea.sflag [#allocation4], 1
    %248 = vsyncpa %s247, 1

</llo_original>
